<compile_context>
chip_gen: v5e
topology: v5e:2x2
jax: 0.10.0
libtpu: 0.0.40
codegen_flags: <defaults>
</compile_context>

<pallas_src>
import functools

import jax
import jax.numpy as jnp
from jax.experimental import pallas as pl
from jax.experimental.pallas import tpu as pltpu

_MIB = 1024 * 1024


def _round_up(x: int, m: int) -> int:
    return (x + m - 1) // m * m


def _device_kind() -> str:
    try:
        return jax.devices()[0].device_kind.lower()
    except Exception:  # pragma: no cover - defensive
        return ""


def _physical_vmem_bytes() -> int:
    kind = _device_kind()
    if any(t in kind for t in ("v3", "v4", "v5", "v6")):
        return 128 * _MIB
    # v7x (64 MiB per TensorCore) or unknown -> be conservative.
    return 64 * _MIB


def _use_bf16_sigmoid() -> bool:
    kind = _device_kind()
    # v5e and older have no bf16 VPU/EUP path -> keep the f32 sigmoid there.
    return not any(t in kind for t in ("v2", "v3", "v4", "v5"))


def _spec(shape, idx_map, single_buffer: bool) -> pl.BlockSpec:
    """BlockSpec helper; single-buffers resident operands when supported."""
    if single_buffer:
        try:
            return pl.BlockSpec(shape, idx_map, pipeline_mode=pl.Buffered(1))
        except (TypeError, AttributeError):
            pass  # older JAX without pipeline_mode / Buffered -> default 2 bufs
    return pl.BlockSpec(shape, idx_map)


def _make_decoder_kernel(bf16_sigmoid: bool):
    def kernel(z_ref, w1_ref, b1_ref, w2_ref, b2_ref, out_ref):
        # Cast activations to bf16 *inside* the kernel (VPU work hidden under
        # DMA/MXU); accumulate both matmuls in f32.
        z = z_ref[...].astype(jnp.bfloat16)
        h = jnp.dot(z, w1_ref[...], preferred_element_type=jnp.float32)
        h = jnp.maximum(h + b1_ref[...], 0.0)              # (TB, H) + (1, H)

        o = jnp.dot(h.astype(jnp.bfloat16), w2_ref[...],
                    preferred_element_type=jnp.float32)
        o = o + b2_ref[...]                                 # f32 bias add
        if bf16_sigmoid:
            o = o.astype(jnp.bfloat16)                      # bf16 EUP (v6e/v7x)
        out_ref[...] = jax.nn.sigmoid(o).astype(out_ref.dtype)

    return kernel


def prepare_decoder_params(w1, b1, w2, b2):
    """One-time weight prep (NOT per forward): cast to bf16 MXU operands and
    pad the output features to a lane-dense multiple of 128."""
    hidden_dim, input_dim = w2.shape
    b1 = jnp.asarray(b1).reshape(1, -1)
    b2 = jnp.asarray(b2).reshape(1, -1)
    Dp = _round_up(input_dim, 128)
    if Dp != input_dim:
        w2 = jnp.pad(w2, ((0, 0), (0, Dp - input_dim)))
        b2 = jnp.pad(b2, ((0, 0), (0, Dp - input_dim)))
    return (w1.astype(jnp.bfloat16),
            b1.astype(jnp.float32),
            w2.astype(jnp.bfloat16),
            b2.astype(jnp.float32),
            input_dim)


@functools.partial(jax.jit,
                   static_argnames=("input_dim", "out_dtype", "tile_b_max"))
def decoder_forward(z, w1_bf, b1_f32, w2_bf, b2_f32, *, input_dim,
                    out_dtype=jnp.bfloat16, tile_b_max=1024):
    """z: (B, latent_dim) f32; params from `prepare_decoder_params`.
    Returns (B, input_dim) in `out_dtype`."""
    B, latent_dim = z.shape
    hidden_dim, Dp = w2_bf.shape
    assert Dp % 128 == 0
    out_bytes = jnp.dtype(out_dtype).itemsize

    vmem_cap = _physical_vmem_bytes()

    # ---- batch tiling: even split of B, rounded to 16 rows (bf16 packing) ----
    n_b = pl.cdiv(B, tile_b_max)
    if n_b == 1 and B >= 32:
        n_b = 2                           # give both v7x TensorCores a tile
    tile_b = _round_up(pl.cdiv(B, n_b), 16)
    Bp = _round_up(B, tile_b)
    grid_b = Bp // tile_b
    if Bp != B:
        z = jnp.pad(z, ((0, Bp - B), (0, 0)))

    # ---- feature tiling fallback: keep W2 resident unless it eats >1/2 VMEM ----
    w2_bytes = hidden_dim * Dp * 2
    if w2_bytes <= vmem_cap // 2:
        tile_n = Dp
    else:
        budget = vmem_cap // 4            # per-buffer budget (double-buffered j)
        tile_n = max(128, min(Dp, (budget // (hidden_dim * 2)) // 128 * 128))
        while Dp % tile_n != 0:           # Dp is a multiple of 128 -> terminates
            tile_n -= 128
    grid_n = Dp // tile_n
    resident_w2 = grid_n == 1

    # ---- VMEM budget: actual footprint + headroom, capped per generation ----
    footprint = (2 * tile_b * latent_dim * 4              # z tile, 2 buffers
                 + 2 * tile_b * tile_n * out_bytes        # out tile, 2 buffers
                 + latent_dim * hidden_dim * 2 + hidden_dim * 4   # W1 + b1
                 + (1 if resident_w2 else 2) * (hidden_dim * tile_n * 2
                                                + tile_n * 4)      # W2 + b2
                 + tile_b * hidden_dim * 4                # h intermediate
                 + tile_b * tile_n * 4)                   # o intermediate
    vmem_limit = min(max(int(footprint * 1.5) + 4 * _MIB, 32 * _MIB),
                     int(vmem_cap * 0.85))

    kernel = _make_decoder_kernel(_use_bf16_sigmoid())

    out_padded = pl.pallas_call(
        kernel,
        out_shape=jax.ShapeDtypeStruct((Bp, Dp), out_dtype),
        grid=(grid_b, grid_n),
        in_specs=[
            _spec((tile_b, latent_dim), lambda i, j: (i, 0), False),   # z tile
            _spec((latent_dim, hidden_dim), lambda i, j: (0, 0), True),  # W1
            _spec((1, hidden_dim), lambda i, j: (0, 0), True),           # b1
            _spec((hidden_dim, tile_n), lambda i, j: (0, j), resident_w2),  # W2
            _spec((1, tile_n), lambda i, j: (0, j), resident_w2),           # b2
        ],
        out_specs=pl.BlockSpec((tile_b, tile_n), lambda i, j: (i, j)),
        compiler_params=pltpu.CompilerParams(
            dimension_semantics=("parallel", "parallel"),
            vmem_limit_bytes=vmem_limit,
        ),
    )(z, w1_bf, b1_f32, w2_bf, b2_f32)

    # slice off batch/feature padding
    return out_padded[:B, :input_dim]


def init_decoder_params(key, input_dim, hidden_dim, latent_dim):
    """Deterministic init matching nn.Linear default (U(-1/sqrt(fan_in), +))."""
    k1, k2, k3, k4 = jax.random.split(key, 4)
    bound1 = 1.0 / jnp.sqrt(latent_dim)
    bound2 = 1.0 / jnp.sqrt(hidden_dim)
    # stored as (in_features, out_features), i.e. transposed vs. PyTorch
    w1 = jax.random.uniform(k1, (latent_dim, hidden_dim), jnp.float32,
                            -bound1, bound1)
    b1 = jax.random.uniform(k2, (1, hidden_dim), jnp.float32, -bound1, bound1)
    w2 = jax.random.uniform(k3, (hidden_dim, input_dim), jnp.float32,
                            -bound2, bound2)
    b2 = jax.random.uniform(k4, (1, input_dim), jnp.float32, -bound2, bound2)
    return w1, b1, w2, b2


def decoder_reference(z, w1, b1, w2, b2):
    h = jax.nn.relu(z @ w1 + b1)
    return jax.nn.sigmoid(h @ w2 + b2)


if __name__ == "__main__":
    # Small shapes consistent with the module's forward pass.
    batch, latent_dim, hidden_dim, input_dim = 8, 16, 32, 64

    key = jax.random.PRNGKey(0)
    kz, kp = jax.random.split(key)
    z = jax.random.normal(kz, (batch, latent_dim), jnp.float32)
    w1, b1, w2, b2 = init_decoder_params(kp, input_dim, hidden_dim, latent_dim)

    # One-time param prep (bf16 cast + lane padding), hoisted out of forward.
    w1_bf, b1_f, w2_bf, b2_f, in_dim = prepare_decoder_params(w1, b1, w2, b2)

    out = decoder_forward(z, w1_bf, b1_f, w2_bf, b2_f, input_dim=in_dim)
    out = jax.block_until_ready(out)

    ref = decoder_reference(z, w1, b1, w2, b2)
    assert out.shape == (batch, input_dim), out.shape
    # bf16 MXU operands / bf16 store -> looser tolerance than pure-f32 path
    err = float(jnp.max(jnp.abs(out.astype(jnp.float32) - ref)))
    assert err < 3e-2, err

    print("KERNEL_OK")
</pallas_src>

<mosaic_0001>
module attributes {stable_mosaic.version = 11 : i64} {
  func.func @kernel(%arg0: i32, %arg1: i32, %arg2: memref<16x16xf32, #tpu.memory_space<vmem>>, %arg3: memref<16x32xbf16, #tpu.memory_space<vmem>>, %arg4: memref<1x32xf32, #tpu.memory_space<vmem>>, %arg5: memref<32x128xbf16, #tpu.memory_space<vmem>>, %arg6: memref<1x128xf32, #tpu.memory_space<vmem>>, %arg7: memref<16x128xbf16, #tpu.memory_space<vmem>>) attributes {dimension_semantics = [#tpu.dimension_semantics<parallel>, #tpu.dimension_semantics<parallel>], iteration_bounds = array<i64: 1, 1>, scalar_prefetch = 0 : i64, scratch_operands = 0 : i64, tpu.core_type = #tpu.core_type<tc>, window_params = [{transform_indices = @transform_0, window_bounds = array<i64: 16, 16>}, {pipeline_mode = #tpu.pipeline_mode<synchronous>, transform_indices = @transform_1, window_bounds = array<i64: 16, 32>}, {pipeline_mode = #tpu.pipeline_mode<synchronous>, transform_indices = @transform_2, window_bounds = array<i64: 1, 32>}, {pipeline_mode = #tpu.pipeline_mode<synchronous>, transform_indices = @transform_3, window_bounds = array<i64: 32, 128>}, {pipeline_mode = #tpu.pipeline_mode<synchronous>, transform_indices = @transform_4, window_bounds = array<i64: 1, 128>}, {transform_indices = @transform_5, window_bounds = array<i64: 16, 128>}]} {
    %c0 = arith.constant 0 : index
    %c0_0 = arith.constant 0 : index
    %0 = vector.load %arg2[%c0, %c0_0] : memref<16x16xf32, #tpu.memory_space<vmem>>, vector<16x16xf32>
    %1 = arith.truncf %0 : vector<16x16xf32> to vector<16x16xbf16>
    %c0_1 = arith.constant 0 : index
    %c0_2 = arith.constant 0 : index
    %2 = vector.load %arg3[%c0_1, %c0_2] : memref<16x32xbf16, #tpu.memory_space<vmem>>, vector<16x32xbf16>
    %cst = arith.constant dense<0.000000e+00> : vector<16x32xf32>
    %3 = tpu.matmul %1, %2, %cst {dimension_numbers = #tpu.dot_dimension_numbers<[1], [0], [0], [1], [0, 0, 1, 1], [], []>} : vector<16x16xbf16>, vector<16x32xbf16>, vector<16x32xf32> -> vector<16x32xf32>
    %c0_3 = arith.constant 0 : index
    %c0_4 = arith.constant 0 : index
    %4 = vector.load %arg4[%c0_3, %c0_4] : memref<1x32xf32, #tpu.memory_space<vmem>>, vector<1x32xf32>
    %5 = vector.broadcast %4 : vector<1x32xf32> to vector<16x32xf32>
    %6 = arith.addf %3, %5 : vector<16x32xf32>
    %cst_5 = arith.constant 0.000000e+00 : f32
    %7 = vector.broadcast %cst_5 : f32 to vector<16x32xf32>
    %8 = arith.maximumf %6, %7 : vector<16x32xf32>
    %9 = arith.truncf %8 : vector<16x32xf32> to vector<16x32xbf16>
    %c0_6 = arith.constant 0 : index
    %c0_7 = arith.constant 0 : index
    %10 = vector.load %arg5[%c0_6, %c0_7] : memref<32x128xbf16, #tpu.memory_space<vmem>>, vector<32x128xbf16>
    %cst_8 = arith.constant dense<0.000000e+00> : vector<16x128xf32>
    %11 = tpu.matmul %9, %10, %cst_8 {dimension_numbers = #tpu.dot_dimension_numbers<[1], [0], [0], [1], [0, 0, 1, 1], [], []>} : vector<16x32xbf16>, vector<32x128xbf16>, vector<16x128xf32> -> vector<16x128xf32>
    %c0_9 = arith.constant 0 : index
    %c0_10 = arith.constant 0 : index
    %12 = vector.load %arg6[%c0_9, %c0_10] : memref<1x128xf32, #tpu.memory_space<vmem>>, vector<1x128xf32>
    %13 = vector.broadcast %12 : vector<1x128xf32> to vector<16x128xf32>
    %14 = arith.addf %11, %13 : vector<16x128xf32>
    %15 = arith.truncf %14 : vector<16x128xf32> to vector<16x128xbf16>
    %16 = arith.negf %15 : vector<16x128xbf16>
    %17 = math.exp %16 : vector<16x128xbf16>
    %cst_11 = arith.constant 1.000000e+00 : bf16
    %18 = vector.broadcast %cst_11 : bf16 to vector<16x128xbf16>
    %19 = arith.addf %18, %17 : vector<16x128xbf16>
    %20 = arith.divf %18, %19 : vector<16x128xbf16>
    %c0_12 = arith.constant 0 : index
    %c0_13 = arith.constant 0 : index
    %21 = vector.load %arg7[%c0_12, %c0_13] : memref<16x128xbf16, #tpu.memory_space<vmem>>, vector<16x128xbf16>
    tpu.vector_store %arg7[%c0_12, %c0_13], %20 {strides = array<i32>} : memref<16x128xbf16, #tpu.memory_space<vmem>>, vector<16x128xbf16>,
    return
  }
  func.func @transform_0(%arg0: i32, %arg1: i32) -> (i32, i32) {
    %c0_i32 = arith.constant 0 : i32
    %c0_i32_0 = arith.constant 0 : i32
    return %arg0, %c0_i32 : i32, i32
  }
  func.func @transform_1(%arg0: i32, %arg1: i32) -> (i32, i32) {
    %c0_i32 = arith.constant 0 : i32
    %c0_i32_0 = arith.constant 0 : i32
    %c0_i32_1 = arith.constant 0 : i32
    return %c0_i32, %c0_i32_0 : i32, i32
  }
  func.func @transform_2(%arg0: i32, %arg1: i32) -> (i32, i32) {
    %c0_i32 = arith.constant 0 : i32
    %c0_i32_0 = arith.constant 0 : i32
    %c0_i32_1 = arith.constant 0 : i32
    return %c0_i32, %c0_i32_0 : i32, i32
  }
  func.func @transform_3(%arg0: i32, %arg1: i32) -> (i32, i32) {
    %c0_i32 = arith.constant 0 : i32
    %c0_i32_0 = arith.constant 0 : i32
    return %c0_i32, %arg1 : i32, i32
  }
  func.func @transform_4(%arg0: i32, %arg1: i32) -> (i32, i32) {
    %c0_i32 = arith.constant 0 : i32
    %c0_i32_0 = arith.constant 0 : i32
    return %c0_i32, %arg1 : i32, i32
  }
  func.func @transform_5(%arg0: i32, %arg1: i32) -> (i32, i32) {
    %c0_i32 = arith.constant 0 : i32
    return %arg0, %arg1 : i32, i32
  }
}

</mosaic_0001>

<llo_original>
// kernel: decoder_forward.1
$region0: #{decoder_forward.1}
  #allocation0 [shape = 'u32[]', space=smem, size = 0x4, offset = 0x4, fixed_abs, tag = 'smem constant byte address 0x4 - core index']
  #allocation1 [shape = 'u32[72,128]{1,0:T(1,128)}', space=vmem, size = 0x9000, scoped, tag = 'internal scratch']
  %s0 = inlined_call_operand.vmem [shape: f32[16,16], index: 0, kind: input, shape index: {}]
  %s1 = inlined_call_operand.vmem [shape: bf16[16,32], index: 1, kind: input, shape index: {}]
  %s2 = inlined_call_operand.vmem [shape: f32[1,32], index: 2, kind: input, shape index: {}]
  %s3 = inlined_call_operand.vmem [shape: bf16[32,128], index: 3, kind: input, shape index: {}]
  %s4 = inlined_call_operand.vmem [shape: f32[1,128], index: 4, kind: input, shape index: {}]
  %s5 = inlined_call_operand.vmem [shape: bf16[16,128], index: 5, kind: output, shape index: {}]
  %s6 = sld [smem:[#allocation0]]
  $region30: #{decoder_forward.1} parent=0
    _
  %s8 = ssub.s32 1, %s6
  %s9 = scalar_select 0, %s8, %s6
  // Predicated region
  $region2: #{decoder_forward.1} parent=0 // pred_check
    _
  $region3: #{decoder_forward.1} parent=0 // pred_check_branch
    %11 = sbr.rel (0) target = $region5
  $region4: #{decoder_forward.1} parent=0 // pred_region
    _
  $region5: #{decoder_forward.1} parent=0 // pred_fallthru
    _
  // Predicated region
  $region6: #{decoder_forward.1} parent=0 // pred_check
    _
  $region7: #{decoder_forward.1} parent=0 // pred_check_branch
    %13 = sbr.rel (0) target = $region9
  $region8: #{decoder_forward.1} parent=0 // pred_region
    _
  $region9: #{decoder_forward.1} parent=0 // pred_fallthru
    _
  // Predicated region
  $region10: #{decoder_forward.1} parent=0 // pred_check
    _
  $region11: #{decoder_forward.1} parent=0 // pred_check_branch
    %15 = sbr.rel (0) target = $region13
  $region12: #{decoder_forward.1} parent=0 // pred_region
    _
  $region13: #{decoder_forward.1} parent=0 // pred_fallthru
    _
  // Predicated region
  $region14: #{decoder_forward.1} parent=0 // pred_check
    _
  $region15: #{decoder_forward.1} parent=0 // pred_check_branch
    %17 = sbr.rel (0) target = $region17
  $region16: #{decoder_forward.1} parent=0 // pred_region
    _
  $region17: #{decoder_forward.1} parent=0 // pred_fallthru
    _
  // Predicated region
  $region18: #{decoder_forward.1} parent=0 // pred_check
    _
  $region19: #{decoder_forward.1} parent=0 // pred_check_branch
    %19 = sbr.rel (0) target = $region21
  $region20: #{decoder_forward.1} parent=0 // pred_region
    _
  $region21: #{decoder_forward.1} parent=0 // pred_fallthru
    _
  %v22 = vld [vmem:[%s0] sm:$0xff]
  %v23 = vld [vmem:[%s0 + $0x8] sm:$0xff]
  %v24 = vpack.c.bf16 %v23, %v22
  %v25 = vld [vmem:[%s1] sm:$0xf]
  %v26 = vld [vmem:[%s1 + $0x4] sm:$0xf]
  %v27 = vld [vmem:[%s2] sm:$0x1]
  %v29 = vperm.slane %v27, 0
  %v33 = vunpack.c.l.b16 %v25
  %v34 = vunpack.c.l.b16 %v26
  %v35 = vpack.c.b16 %v34, %v33
  %vm37 = vcmask 130048
  %v39 = vsel %vm37, %v24, 0
  %41 = vmatpush.bf16.msra.mxu0 0
  %42 = vmatpush.bf16.msra.mxu0 0
  %43 = vmatpush.bf16.msra.mxu0 0
  %44 = vmatpush.bf16.msra.mxu0 0
  %45 = vmatpush.bf16.msra.mxu0 0
  %46 = vmatpush.bf16.msra.mxu0 0
  %47 = vmatpush.bf16.msra.mxu0 0
  %48 = vmatpush.bf16.msra.mxu0 %v35
  %49 = vmatmul.bf16.gmra.mxu0 %v39
  %v50 = vpop.f32.mrf.mxu0
  %v51 = vadd.f32 %v29, %v50
  %v52 = vpop.f32.mrf.mxu0
  %v53 = vadd.f32 %v29, %v52
  %54 = vdwg.mxu0
  %v55 = vmax.f32 %v51, 0.0
  %v56 = vmax.f32 %v53, 0.0
  %v57 = vpack.c.bf16 %v56, %v55
  %v58 = vld [vmem:[%s3] sm:$0xf]
  %v59 = vld [vmem:[%s3 + $0x4] sm:$0xf]
  %v60 = vld [vmem:[%s3 + $0x8] sm:$0xf]
  %v61 = vld [vmem:[%s3 + $0xc] sm:$0xf]
  %v62 = vld [vmem:[%s4] sm:$0x1]
  %v64 = vperm.slane %v62, 0
  %v70 = vunpack.c.l.b16 %v58
  %v71 = vunpack.c.l.b16 %v59
  %v72 = vunpack.c.l.b16 %v60
  %v73 = vunpack.c.l.b16 %v61
  %v74 = vpack.c.b16 %v71, %v70
  %v75 = vpack.c.b16 %v73, %v72
  %vm78 = vcmask 261120
  %v80 = vsel %vm78, %v57, 0
  %82 = vmatpush.bf16.msra.mxu0 0
  %83 = vmatpush.bf16.msra.mxu0 0
  %84 = vmatpush.bf16.msra.mxu0 0
  %85 = vmatpush.bf16.msra.mxu0 0
  %86 = vmatpush.bf16.msra.mxu0 0
  %87 = vmatpush.bf16.msra.mxu0 0
  %88 = vmatpush.bf16.msra.mxu0 %v75
  %89 = vmatpush.bf16.msra.mxu0 %v74
  %90 = vmatmul.bf16.gmra.mxu0 %v80
  %v91 = vpop.f32.mrf.mxu0
  %v92 = vadd.f32 %v64, %v91
  %v93 = vpop.f32.mrf.mxu0
  %v94 = vadd.f32 %v64, %v93
  %95 = vdwg.mxu0
  %v96 = vpack.c.bf16 %v92, %v92
  %v97 = vpack.c.bf16 %v94, %v94
  %v98 = vxor.u32 %v96, 2147516416
  %v99 = vxor.u32 %v97, 2147516416
  %v100 = vunpack.c.l.bf16 %v98
  %v101 = vunpack.c.l.bf16 %v99
  %v102 = vmul.f32 %v100, 1.442695
  %v103 = vpow.pop %v102
  %v104 = vmul.f32 %v101, 1.442695
  %v105 = vpow.pop %v104
  %v106 = vpack.c.bf16 %v103, %v103
  %v107 = vpack.c.bf16 %v105, %v105
  %v108 = vunpack.c.l.bf16 %v106
  %v109 = vunpack.c.l.bf16 %v107
  %v110 = vadd.f32 %v108, 1.0
  %v111 = vadd.f32 %v109, 1.0
  %v112 = vpack.c.bf16 %v110, %v110
  %v113 = vpack.c.bf16 %v111, %v111
  %v114 = vunpack.c.h.bf16 1065369472
  %v115 = vunpack.c.l.bf16 1065369472
  %v116 = vunpack.c.h.bf16 %v112
  %v117 = vunpack.c.l.bf16 %v112
  %v118 = vrcp.pop %v116
  %v119 = vmul.f32 %v114, %v118
  %v120 = vrcp.pop %v117
  %v121 = vmul.f32 %v115, %v120
  %v122 = vpack.c.bf16 %v119, %v121
  %v123 = vunpack.c.h.bf16 %v113
  %v124 = vunpack.c.l.bf16 %v113
  %v125 = vrcp.pop %v123
  %v126 = vmul.f32 %v114, %v125
  %v127 = vrcp.pop %v124
  %v128 = vmul.f32 %v115, %v127
  %v129 = vpack.c.bf16 %v126, %v128
  %130 = vst [vmem:[%s5] sm:$0xf] %v122
  %131 = vst [vmem:[%s5 + $0x4] sm:$0xf] %v129
  // Predicated region
  $region22: #{decoder_forward.1} parent=0 // pred_check
    _
  $region23: #{decoder_forward.1} parent=0 // pred_check_branch
    %133 = sbr.rel (0) target = $region25
  $region24: #{decoder_forward.1} parent=0 // pred_region
    _
  $region25: #{decoder_forward.1} parent=0 // pred_fallthru
    _
  // Predicated region
  $region26: #{decoder_forward.1} parent=0 // pred_check
    _
  $region27: #{decoder_forward.1} parent=0 // pred_check_branch
    %135 = sbr.rel (0) target = $region29
  $region28: #{decoder_forward.1} parent=0 // pred_region
    _
  $region29: #{decoder_forward.1} parent=0 // pred_fallthru
    _

</llo_original>
